<compile_context>
chip_gen: v5e
topology: v5e:2x2
jax: 0.10.0
libtpu: 0.0.40
codegen_flags: <defaults>
</compile_context>

<pallas_src>
import math

import jax
import jax.numpy as jnp
from jax.experimental import pallas as pl
from jax.experimental.pallas import tpu as pltpu


def _cdiv(a, b):
    return (a + b - 1) // b


def _round_up(a, b):
    return _cdiv(a, b) * b


def _bert_head_kernel(x_ref, w_ref, b_ref, g_ref, beta_ref, o_ref):
    # x_ref: (TM, H) f32   w_ref: (H, H) bf16, pre-transposed (in x out)
    # b_ref/g_ref/beta_ref: (1, H) f32   o_ref: (TM, H)
    x = x_ref[...].astype(jnp.bfloat16)                     # bf16 MXU operand
    h = jnp.dot(x, w_ref[...], preferred_element_type=jnp.float32)
    h = h + b_ref[...]                                      # f32 from here on

    # gelu_new (BERT / GPT tanh approximation)
    c = math.sqrt(2.0 / math.pi)
    h = 0.5 * h * (1.0 + jnp.tanh(c * (h + 0.044715 * (h * h * h))))

    # LayerNorm over the hidden dim, eps = 1e-12 (population variance)
    mu = jnp.mean(h, axis=-1, keepdims=True)
    centered = h - mu
    var = jnp.mean(centered * centered, axis=-1, keepdims=True)
    inv = jax.lax.rsqrt(var + 1e-12)
    o_ref[...] = (centered * inv * g_ref[...] + beta_ref[...]).astype(o_ref.dtype)


def _build_call(M_pad, H, tm, out_dtype, *, single_buffer_invariants):
    # Weight / bias / gamma / beta have constant index_maps; request 1-deep
    # buffering so they don't reserve 2x VMEM.
    inv_kwargs = (
        dict(pipeline_mode=pl.Buffered(1)) if single_buffer_invariants else {}
    )

    # VMEM budget: double-buffered streamed x/out tiles (f32), resident bf16
    # weight (allow 2 copies in case single-buffering is unavailable), params,
    # in-kernel f32 temporaries, + headroom.  Never below the 32 MiB default.
    streamed = 2 * 2 * tm * H * 4
    resident = 2 * H * H * 2 + 8 * H * 4
    temps = 6 * tm * H * 4
    vmem_limit = max(32 * 1024 * 1024,
                     min(100 * 1024 * 1024,
                         streamed + resident + temps + (1 << 20)))

    cost = pl.CostEstimate(
        flops=2 * M_pad * H * H,
        transcendentals=M_pad * H,
        bytes_accessed=2 * M_pad * H * 4 + H * H * 2 + 3 * H * 4,
    )

    return pl.pallas_call(
        _bert_head_kernel,
        out_shape=jax.ShapeDtypeStruct((M_pad, H), out_dtype),
        grid_spec=pltpu.PrefetchScalarGridSpec(
            num_scalar_prefetch=0,
            grid=(M_pad // tm,),
            in_specs=[
                pl.BlockSpec((tm, H), lambda i: (i, 0)),                # x rows
                pl.BlockSpec((H, H), lambda i: (0, 0), **inv_kwargs),   # weight
                pl.BlockSpec((1, H), lambda i: (0, 0), **inv_kwargs),   # bias
                pl.BlockSpec((1, H), lambda i: (0, 0), **inv_kwargs),   # gamma
                pl.BlockSpec((1, H), lambda i: (0, 0), **inv_kwargs),   # beta
            ],
            out_specs=pl.BlockSpec((tm, H), lambda i: (i, 0)),
        ),
        compiler_params=pltpu.CompilerParams(
            dimension_semantics=("parallel",),     # shards rows across TCs (v7x)
            vmem_limit_bytes=int(vmem_limit),
        ),
        cost_estimate=cost,
    )


def bert_prediction_head_transform(hidden_states, weight, bias, gamma, beta,
                                   *, tm=256):
    """hidden_states: (B, S, H) f32; weight: (H, H) in torch Linear layout (out, in)."""
    B, S, H = hidden_states.shape
    M = B * S

    # Large row tile for MXU utilization; clamp for small inputs, keep it a
    # multiple of 8 sublanes.
    tm = max(8, min(tm, _round_up(M, 8)))
    M_pad = _round_up(M, tm)

    x2d = hidden_states.reshape(M, H)
    if M_pad != M:
        x2d = jnp.pad(x2d, ((0, M_pad - M), (0, 0)))

    w_t = weight.T.astype(jnp.bfloat16)           # (in, out): kernel does x @ w_t
    b2d = bias.reshape(1, H).astype(jnp.float32)
    g2d = gamma.reshape(1, H).astype(jnp.float32)
    beta2d = beta.reshape(1, H).astype(jnp.float32)

    args = (x2d, w_t, b2d, g2d, beta2d)
    try:
        out = _build_call(M_pad, H, tm, hidden_states.dtype,
                          single_buffer_invariants=True)(*args)
    except Exception:
        # pl.Buffered(1) unsupported on this jax version -> default buffering.
        out = _build_call(M_pad, H, tm, hidden_states.dtype,
                          single_buffer_invariants=False)(*args)

    if M_pad != M:
        out = out[:M]
    return out.reshape(B, S, H)


def _reference(hidden_states, weight, bias, gamma, beta):
    h = jnp.einsum("bsh,oh->bso", hidden_states, weight,
                   precision=jax.lax.Precision.HIGHEST) + bias
    c = math.sqrt(2.0 / math.pi)
    h = 0.5 * h * (1.0 + jnp.tanh(c * (h + 0.044715 * h ** 3)))
    mu = jnp.mean(h, axis=-1, keepdims=True)
    var = jnp.mean((h - mu) ** 2, axis=-1, keepdims=True)
    return (h - mu) / jnp.sqrt(var + 1e-12) * gamma + beta


if __name__ == "__main__":
    H = 128
    key = jax.random.PRNGKey(0)
    kx, kw, kb, kg, kbt, kx2 = jax.random.split(key, 6)

    # deterministic synthetic params (torch Linear weight layout: (out, in))
    weight = jax.random.normal(kw, (H, H), dtype=jnp.float32) * (1.0 / math.sqrt(H))
    bias = jax.random.normal(kb, (H,), dtype=jnp.float32) * 0.02
    gamma = 1.0 + 0.1 * jax.random.normal(kg, (H,), dtype=jnp.float32)
    beta = 0.1 * jax.random.normal(kbt, (H,), dtype=jnp.float32)

    # small shape (single short grid step, tm clamped to row count)
    B, S = 2, 8
    x_small = jax.random.normal(kx, (B, S, H), dtype=jnp.float32)
    out_small = jax.block_until_ready(
        bert_prediction_head_transform(x_small, weight, bias, gamma, beta))
    ref_small = _reference(x_small, weight, bias, gamma, beta)
    assert out_small.shape == (B, S, H)
    # bf16 MXU operands (f32 accumulation) -> loosened tolerance vs f32 reference
    assert jnp.allclose(out_small, ref_small, atol=3e-2, rtol=3e-2), "mismatch (small)"

    # ragged shape: exercises the padding + multi-step tiled grid path
    B2, S2 = 2, 136                      # M = 272 -> padded to 512, grid = 2
    x_rag = jax.random.normal(kx2, (B2, S2, H), dtype=jnp.float32)
    out_rag = jax.block_until_ready(
        bert_prediction_head_transform(x_rag, weight, bias, gamma, beta))
    ref_rag = _reference(x_rag, weight, bias, gamma, beta)
    assert out_rag.shape == (B2, S2, H)
    assert jnp.allclose(out_rag, ref_rag, atol=3e-2, rtol=3e-2), "mismatch (ragged)"

    print("KERNEL_OK")
</pallas_src>

<mosaic_0001>
module attributes {stable_mosaic.version = 11 : i64} {
  func.func @_bert_head_kernel(%arg0: i32, %arg1: memref<16x128xf32, #tpu.memory_space<vmem>>, %arg2: memref<128x128xbf16, #tpu.memory_space<vmem>>, %arg3: memref<1x128xf32, #tpu.memory_space<vmem>>, %arg4: memref<1x128xf32, #tpu.memory_space<vmem>>, %arg5: memref<1x128xf32, #tpu.memory_space<vmem>>, %arg6: memref<16x128xf32, #tpu.memory_space<vmem>>) attributes {dimension_semantics = [#tpu.dimension_semantics<parallel>], iteration_bounds = array<i64: 1>, scalar_prefetch = 0 : i64, scratch_operands = 0 : i64, tpu.core_type = #tpu.core_type<tc>, window_params = [{transform_indices = @transform_0, window_bounds = array<i64: 16, 128>}, {pipeline_mode = #tpu.pipeline_mode<synchronous>, transform_indices = @transform_1, window_bounds = array<i64: 128, 128>}, {pipeline_mode = #tpu.pipeline_mode<synchronous>, transform_indices = @transform_2, window_bounds = array<i64: 1, 128>}, {pipeline_mode = #tpu.pipeline_mode<synchronous>, transform_indices = @transform_3, window_bounds = array<i64: 1, 128>}, {pipeline_mode = #tpu.pipeline_mode<synchronous>, transform_indices = @transform_4, window_bounds = array<i64: 1, 128>}, {transform_indices = @transform_5, window_bounds = array<i64: 16, 128>}]} {
    %c0 = arith.constant 0 : index
    %c0_0 = arith.constant 0 : index
    %0 = vector.load %arg1[%c0, %c0_0] : memref<16x128xf32, #tpu.memory_space<vmem>>, vector<16x128xf32>
    %1 = arith.truncf %0 : vector<16x128xf32> to vector<16x128xbf16>
    %c0_1 = arith.constant 0 : index
    %c0_2 = arith.constant 0 : index
    %2 = vector.load %arg2[%c0_1, %c0_2] : memref<128x128xbf16, #tpu.memory_space<vmem>>, vector<128x128xbf16>
    %cst = arith.constant dense<0.000000e+00> : vector<16x128xf32>
    %3 = tpu.matmul %1, %2, %cst {dimension_numbers = #tpu.dot_dimension_numbers<[1], [0], [0], [1], [0, 0, 1, 1], [], []>} : vector<16x128xbf16>, vector<128x128xbf16>, vector<16x128xf32> -> vector<16x128xf32>
    %c0_3 = arith.constant 0 : index
    %c0_4 = arith.constant 0 : index
    %4 = vector.load %arg3[%c0_3, %c0_4] : memref<1x128xf32, #tpu.memory_space<vmem>>, vector<1x128xf32>
    %5 = vector.broadcast %4 : vector<1x128xf32> to vector<16x128xf32>
    %6 = arith.addf %3, %5 : vector<16x128xf32>
    %cst_5 = arith.constant 5.000000e-01 : f32
    %7 = vector.broadcast %cst_5 : f32 to vector<16x128xf32>
    %8 = arith.mulf %7, %6 : vector<16x128xf32>
    %9 = arith.mulf %6, %6 : vector<16x128xf32>
    %10 = arith.mulf %9, %6 : vector<16x128xf32>
    %cst_6 = arith.constant 4.471500e-02 : f32
    %11 = vector.broadcast %cst_6 : f32 to vector<16x128xf32>
    %12 = arith.mulf %11, %10 : vector<16x128xf32>
    %13 = arith.addf %6, %12 : vector<16x128xf32>
    %cst_7 = arith.constant 0.797884583 : f32
    %14 = vector.broadcast %cst_7 : f32 to vector<16x128xf32>
    %15 = arith.mulf %14, %13 : vector<16x128xf32>
    %16 = math.tanh %15 : vector<16x128xf32>
    %cst_8 = arith.constant 1.000000e+00 : f32
    %17 = vector.broadcast %cst_8 : f32 to vector<16x128xf32>
    %18 = arith.addf %17, %16 : vector<16x128xf32>
    %19 = arith.mulf %8, %18 : vector<16x128xf32>
    %cst_9 = arith.constant dense<0.000000e+00> : vector<16xf32>
    %20 = vector.multi_reduction <add>, %19, %cst_9 [1] : vector<16x128xf32> to vector<16xf32>
    %21 = vector.shape_cast %20 : vector<16xf32> to vector<16x1xf32>
    %cst_10 = arith.constant 1.280000e+02 : f32
    %22 = vector.broadcast %cst_10 : f32 to vector<16x1xf32>
    %23 = arith.divf %21, %22 : vector<16x1xf32>
    %24 = vector.broadcast %23 : vector<16x1xf32> to vector<16x128xf32>
    %25 = arith.subf %19, %24 : vector<16x128xf32>
    %26 = arith.mulf %25, %25 : vector<16x128xf32>
    %cst_11 = arith.constant dense<0.000000e+00> : vector<16xf32>
    %27 = vector.multi_reduction <add>, %26, %cst_11 [1] : vector<16x128xf32> to vector<16xf32>
    %28 = vector.shape_cast %27 : vector<16xf32> to vector<16x1xf32>
    %cst_12 = arith.constant 1.280000e+02 : f32
    %29 = vector.broadcast %cst_12 : f32 to vector<16x1xf32>
    %30 = arith.divf %28, %29 : vector<16x1xf32>
    %cst_13 = arith.constant 9.99999996E-13 : f32
    %31 = vector.broadcast %cst_13 : f32 to vector<16x1xf32>
    %32 = arith.addf %30, %31 : vector<16x1xf32>
    %33 = math.rsqrt %32 : vector<16x1xf32>
    %34 = vector.broadcast %33 : vector<16x1xf32> to vector<16x128xf32>
    %35 = arith.mulf %25, %34 : vector<16x128xf32>
    %c0_14 = arith.constant 0 : index
    %c0_15 = arith.constant 0 : index
    %36 = vector.load %arg4[%c0_14, %c0_15] : memref<1x128xf32, #tpu.memory_space<vmem>>, vector<1x128xf32>
    %37 = vector.broadcast %36 : vector<1x128xf32> to vector<16x128xf32>
    %38 = arith.mulf %35, %37 : vector<16x128xf32>
    %c0_16 = arith.constant 0 : index
    %c0_17 = arith.constant 0 : index
    %39 = vector.load %arg5[%c0_16, %c0_17] : memref<1x128xf32, #tpu.memory_space<vmem>>, vector<1x128xf32>
    %40 = vector.broadcast %39 : vector<1x128xf32> to vector<16x128xf32>
    %41 = arith.addf %38, %40 : vector<16x128xf32>
    %c0_18 = arith.constant 0 : index
    %c0_19 = arith.constant 0 : index
    %42 = vector.load %arg6[%c0_18, %c0_19] : memref<16x128xf32, #tpu.memory_space<vmem>>, vector<16x128xf32>
    tpu.vector_store %arg6[%c0_18, %c0_19], %41 {strides = array<i32>} : memref<16x128xf32, #tpu.memory_space<vmem>>, vector<16x128xf32>,
    return
  }
  func.func @transform_0(%arg0: i32) -> (i32, i32) {
    %c0_i32 = arith.constant 0 : i32
    %c0_i32_0 = arith.constant 0 : i32
    return %arg0, %c0_i32 : i32, i32
  }
  func.func @transform_1(%arg0: i32) -> (i32, i32) {
    %c0_i32 = arith.constant 0 : i32
    %c0_i32_0 = arith.constant 0 : i32
    %c0_i32_1 = arith.constant 0 : i32
    return %c0_i32, %c0_i32_0 : i32, i32
  }
  func.func @transform_2(%arg0: i32) -> (i32, i32) {
    %c0_i32 = arith.constant 0 : i32
    %c0_i32_0 = arith.constant 0 : i32
    %c0_i32_1 = arith.constant 0 : i32
    return %c0_i32, %c0_i32_0 : i32, i32
  }
  func.func @transform_3(%arg0: i32) -> (i32, i32) {
    %c0_i32 = arith.constant 0 : i32
    %c0_i32_0 = arith.constant 0 : i32
    %c0_i32_1 = arith.constant 0 : i32
    return %c0_i32, %c0_i32_0 : i32, i32
  }
  func.func @transform_4(%arg0: i32) -> (i32, i32) {
    %c0_i32 = arith.constant 0 : i32
    %c0_i32_0 = arith.constant 0 : i32
    %c0_i32_1 = arith.constant 0 : i32
    return %c0_i32, %c0_i32_0 : i32, i32
  }
  func.func @transform_5(%arg0: i32) -> (i32, i32) {
    %c0_i32 = arith.constant 0 : i32
    %c0_i32_0 = arith.constant 0 : i32
    return %arg0, %c0_i32 : i32, i32
  }
}

module attributes {stable_mosaic.version = 11 : i64} {
  func.func @_bert_head_kernel(%arg0: i32, %arg1: memref<16x128xf32, #tpu.memory_space<vmem>>, %arg2: memref<128x128xbf16, #tpu.memory_space<vmem>>, %arg3: memref<1x128xf32, #tpu.memory_space<vmem>>, %arg4: memref<1x128xf32, #tpu.memory_space<vmem>>, %arg5: memref<1x128xf32, #tpu.memory_space<vmem>>, %arg6: memref<16x128xf32, #tpu.memory_space<vmem>>) attributes {dimension_semantics = [#tpu.dimension_semantics<parallel>], iteration_bounds = array<i64: 1>, scalar_prefetch = 0 : i64, scratch_operands = 0 : i64, tpu.core_type = #tpu.core_type<tc>, window_params = [{transform_indices = @transform_0, window_bounds = array<i64: 16, 128>}, {pipeline_mode = #tpu.pipeline_mode<synchronous>, transform_indices = @transform_1, window_bounds = array<i64: 128, 128>}, {pipeline_mode = #tpu.pipeline_mode<synchronous>, transform_indices = @transform_2, window_bounds = array<i64: 1, 128>}, {pipeline_mode = #tpu.pipeline_mode<synchronous>, transform_indices = @transform_3, window_bounds = array<i64: 1, 128>}, {pipeline_mode = #tpu.pipeline_mode<synchronous>, transform_indices = @transform_4, window_bounds = array<i64: 1, 128>}, {transform_indices = @transform_5, window_bounds = array<i64: 16, 128>}]} {
    %c0 = arith.constant 0 : index
    %c0_0 = arith.constant 0 : index
    %0 = vector.load %arg1[%c0, %c0_0] : memref<16x128xf32, #tpu.memory_space<vmem>>, vector<16x128xf32>
    %1 = arith.truncf %0 : vector<16x128xf32> to vector<16x128xbf16>
    %c0_1 = arith.constant 0 : index
    %c0_2 = arith.constant 0 : index
    %2 = vector.load %arg2[%c0_1, %c0_2] : memref<128x128xbf16, #tpu.memory_space<vmem>>, vector<128x128xbf16>
    %cst = arith.constant dense<0.000000e+00> : vector<16x128xf32>
    %3 = tpu.matmul %1, %2, %cst {dimension_numbers = #tpu.dot_dimension_numbers<[1], [0], [0], [1], [0, 0, 1, 1], [], []>} : vector<16x128xbf16>, vector<128x128xbf16>, vector<16x128xf32> -> vector<16x128xf32>
    %c0_3 = arith.constant 0 : index
    %c0_4 = arith.constant 0 : index
    %4 = vector.load %arg3[%c0_3, %c0_4] : memref<1x128xf32, #tpu.memory_space<vmem>>, vector<1x128xf32>
    %5 = vector.broadcast %4 : vector<1x128xf32> to vector<16x128xf32>
    %6 = arith.addf %3, %5 : vector<16x128xf32>
    %cst_5 = arith.constant 5.000000e-01 : f32
    %7 = vector.broadcast %cst_5 : f32 to vector<16x128xf32>
    %8 = arith.mulf %7, %6 : vector<16x128xf32>
    %9 = arith.mulf %6, %6 : vector<16x128xf32>
    %10 = arith.mulf %9, %6 : vector<16x128xf32>
    %cst_6 = arith.constant 4.471500e-02 : f32
    %11 = vector.broadcast %cst_6 : f32 to vector<16x128xf32>
    %12 = arith.mulf %11, %10 : vector<16x128xf32>
    %13 = arith.addf %6, %12 : vector<16x128xf32>
    %cst_7 = arith.constant 0.797884583 : f32
    %14 = vector.broadcast %cst_7 : f32 to vector<16x128xf32>
    %15 = arith.mulf %14, %13 : vector<16x128xf32>
    %16 = math.tanh %15 : vector<16x128xf32>
    %cst_8 = arith.constant 1.000000e+00 : f32
    %17 = vector.broadcast %cst_8 : f32 to vector<16x128xf32>
    %18 = arith.addf %17, %16 : vector<16x128xf32>
    %19 = arith.mulf %8, %18 : vector<16x128xf32>
    %cst_9 = arith.constant dense<0.000000e+00> : vector<16xf32>
    %20 = vector.multi_reduction <add>, %19, %cst_9 [1] : vector<16x128xf32> to vector<16xf32>
    %21 = vector.shape_cast %20 : vector<16xf32> to vector<16x1xf32>
    %cst_10 = arith.constant 1.280000e+02 : f32
    %22 = vector.broadcast %cst_10 : f32 to vector<16x1xf32>
    %23 = arith.divf %21, %22 : vector<16x1xf32>
    %24 = vector.broadcast %23 : vector<16x1xf32> to vector<16x128xf32>
    %25 = arith.subf %19, %24 : vector<16x128xf32>
    %26 = arith.mulf %25, %25 : vector<16x128xf32>
    %cst_11 = arith.constant dense<0.000000e+00> : vector<16xf32>
    %27 = vector.multi_reduction <add>, %26, %cst_11 [1] : vector<16x128xf32> to vector<16xf32>
    %28 = vector.shape_cast %27 : vector<16xf32> to vector<16x1xf32>
    %cst_12 = arith.constant 1.280000e+02 : f32
    %29 = vector.broadcast %cst_12 : f32 to vector<16x1xf32>
    %30 = arith.divf %28, %29 : vector<16x1xf32>
    %cst_13 = arith.constant 9.99999996E-13 : f32
    %31 = vector.broadcast %cst_13 : f32 to vector<16x1xf32>
    %32 = arith.addf %30, %31 : vector<16x1xf32>
    %33 = math.rsqrt %32 : vector<16x1xf32>
    %34 = vector.broadcast %33 : vector<16x1xf32> to vector<16x128xf32>
    %35 = arith.mulf %25, %34 : vector<16x128xf32>
    %c0_14 = arith.constant 0 : index
    %c0_15 = arith.constant 0 : index
    %36 = vector.load %arg4[%c0_14, %c0_15] : memref<1x128xf32, #tpu.memory_space<vmem>>, vector<1x128xf32>
    %37 = vector.broadcast %36 : vector<1x128xf32> to vector<16x128xf32>
    %38 = arith.mulf %35, %37 : vector<16x128xf32>
    %c0_16 = arith.constant 0 : index
    %c0_17 = arith.constant 0 : index
    %39 = vector.load %arg5[%c0_16, %c0_17] : memref<1x128xf32, #tpu.memory_space<vmem>>, vector<1x128xf32>
    %40 = vector.broadcast %39 : vector<1x128xf32> to vector<16x128xf32>
    %41 = arith.addf %38, %40 : vector<16x128xf32>
    %c0_18 = arith.constant 0 : index
    %c0_19 = arith.constant 0 : index
    %42 = vector.load %arg6[%c0_18, %c0_19] : memref<16x128xf32, #tpu.memory_space<vmem>>, vector<16x128xf32>
    tpu.vector_store %arg6[%c0_18, %c0_19], %41 {strides = array<i32>} : memref<16x128xf32, #tpu.memory_space<vmem>>, vector<16x128xf32>,
    return
  }
  func.func @transform_0(%arg0: i32) -> (i32, i32) {
    %c0_i32 = arith.constant 0 : i32
    %c0_i32_0 = arith.constant 0 : i32
    return %arg0, %c0_i32 : i32, i32
  }
  func.func @transform_1(%arg0: i32) -> (i32, i32) {
    %c0_i32 = arith.constant 0 : i32
    %c0_i32_0 = arith.constant 0 : i32
    %c0_i32_1 = arith.constant 0 : i32
    return %c0_i32, %c0_i32_0 : i32, i32
  }
  func.func @transform_2(%arg0: i32) -> (i32, i32) {
    %c0_i32 = arith.constant 0 : i32
    %c0_i32_0 = arith.constant 0 : i32
    %c0_i32_1 = arith.constant 0 : i32
    return %c0_i32, %c0_i32_0 : i32, i32
  }
  func.func @transform_3(%arg0: i32) -> (i32, i32) {
    %c0_i32 = arith.constant 0 : i32
    %c0_i32_0 = arith.constant 0 : i32
    %c0_i32_1 = arith.constant 0 : i32
    return %c0_i32, %c0_i32_0 : i32, i32
  }
  func.func @transform_4(%arg0: i32) -> (i32, i32) {
    %c0_i32 = arith.constant 0 : i32
    %c0_i32_0 = arith.constant 0 : i32
    %c0_i32_1 = arith.constant 0 : i32
    return %c0_i32, %c0_i32_0 : i32, i32
  }
  func.func @transform_5(%arg0: i32) -> (i32, i32) {
    %c0_i32 = arith.constant 0 : i32
    %c0_i32_0 = arith.constant 0 : i32
    return %arg0, %c0_i32 : i32, i32
  }
}

</mosaic_0001>

<llo_original>
// kernel: tpu_custom_call.1
$region0: #{tpu_custom_call.1}
  #allocation0 [shape = 'u32[]', space=smem, size = 0x4, offset = 0x4, fixed_abs, tag = 'smem constant byte address 0x4 - core index']
  #allocation1 [shape = 'u32[72,128]{1,0:T(1,128)}', space=vmem, size = 0x9000, scoped, tag = 'internal scratch']
  %s0 = inlined_call_operand.hbm [shape: f32[16,128], index: 0, kind: input, shape index: {}]
  %s1 = inlined_call_operand.hbm [shape: bf16[128,128], index: 1, kind: input, shape index: {}]
  %s2 = inlined_call_operand.vmem [shape: f32[1,128], index: 2, kind: input, shape index: {}]
  %s3 = inlined_call_operand.vmem [shape: f32[1,128], index: 3, kind: input, shape index: {}]
  %s4 = inlined_call_operand.vmem [shape: f32[1,128], index: 4, kind: input, shape index: {}]
  %s5 = inlined_call_operand.hbm [shape: f32[16,128], index: 5, kind: output, shape index: {}]
  %s6 = sld [smem:[#allocation0]]
  $region38: #{tpu_custom_call.1} parent=0
    _
  %s8 = ssub.s32 1, %s6
  %s9 = scalar_select 0, %s8, %s6
  $region1: #{tpu_custom_call.1} parent=0
    #allocation2 [shape = 'u8[8192]{0}', space=vmem, size = 0x2000, scoped, tag = 'input window, operand 0, single buffered']
    #allocation3 [shape = 's32[1]{0}', space=sflag, size = 0x4, scoped, tag = 'scoped memory for tpu_custom_call.1']
    #allocation4 [shape = 's32[1]{0}', space=sflag, size = 0x4, scoped, tag = 'scoped memory for tpu_custom_call.1']
    #allocation5 [shape = 'u8[32768]{0}', space=vmem, size = 0x8000, scoped, tag = 'input window, operand 1, single buffered']
    #allocation6 [shape = 's32[1]{0}', space=sflag, size = 0x4, scoped, tag = 'scoped memory for tpu_custom_call.1']
    #allocation7 [shape = 'u8[8192]{0}', space=vmem, size = 0x2000, scoped, tag = 'output window, operand 0, single buffered']
    %10 = vsyncpa [#allocation3], 0
    %11 = vsyncpa [#allocation6], 0
    %12 = vsyncpa [#allocation4], 0
    // Predicated region
    $region2: #{tpu_custom_call.1} parent=1 // pred_check
      _
    $region3: #{tpu_custom_call.1} parent=1 // pred_check_branch
      %14 = sbr.rel (0) target = $region5
    $region4: #{tpu_custom_call.1} parent=1 // pred_region
      %16 = vsyncadd [#allocation3], 0
      %s17 = sshll.u32 %s0, 4
      %s18 = int_to_ptr.hbm [resolvable:$true] %s17
      %s19 = sshll.u32 [#allocation2], 4
      %s20 = int_to_ptr.vmem [resolvable:$true] %s19
      %25 = dma.hbm_to_vmem [thread:$0]  %s18, 256, %s20, [#allocation3], 128, 128, 8
    $region5: #{tpu_custom_call.1} parent=1 // pred_fallthru
      _
    // Predicated region
    $region6: #{tpu_custom_call.1} parent=1 // pred_check
      _
    $region7: #{tpu_custom_call.1} parent=1 // pred_check_branch
      %27 = sbr.rel (0) target = $region9
    $region8: #{tpu_custom_call.1} parent=1 // pred_region
      %29 = vsyncadd [#allocation6], 0
      %s30 = sshll.u32 %s1, 4
      %s31 = int_to_ptr.hbm [resolvable:$true] %s30
      %s32 = sshll.u32 [#allocation5], 4
      %s33 = int_to_ptr.vmem [resolvable:$true] %s32
      %38 = dma.hbm_to_vmem [thread:$0]  %s31, 1024, %s33, [#allocation6], 64, 64, 4
    $region9: #{tpu_custom_call.1} parent=1 // pred_fallthru
      _
    // Predicated region
    $region10: #{tpu_custom_call.1} parent=1 // pred_check
      _
    $region11: #{tpu_custom_call.1} parent=1 // pred_check_branch
      %40 = sbr.rel (0) target = $region13
    $region12: #{tpu_custom_call.1} parent=1 // pred_region
      _
    $region13: #{tpu_custom_call.1} parent=1 // pred_fallthru
      _
    // Predicated region
    $region14: #{tpu_custom_call.1} parent=1 // pred_check
      _
    $region15: #{tpu_custom_call.1} parent=1 // pred_check_branch
      %42 = sbr.rel (0) target = $region17
    $region16: #{tpu_custom_call.1} parent=1 // pred_region
      _
    $region17: #{tpu_custom_call.1} parent=1 // pred_fallthru
      _
    // Predicated region
    $region18: #{tpu_custom_call.1} parent=1 // pred_check
      _
    $region19: #{tpu_custom_call.1} parent=1 // pred_check_branch
      %44 = sbr.rel (0) target = $region21
    $region20: #{tpu_custom_call.1} parent=1 // pred_region
      _
    $region21: #{tpu_custom_call.1} parent=1 // pred_fallthru
      _
    // Predicated region
    $region22: #{tpu_custom_call.1} parent=1 // pred_check
      _
    $region23: #{tpu_custom_call.1} parent=1 // pred_check_branch
      %46 = sbr.rel (0) target = $region25
    $region24: #{tpu_custom_call.1} parent=1 // pred_region
      %48 = dma.done [#allocation3], 256
    $region25: #{tpu_custom_call.1} parent=1 // pred_fallthru
      _
    // Predicated region
    $region26: #{tpu_custom_call.1} parent=1 // pred_check
      _
    $region27: #{tpu_custom_call.1} parent=1 // pred_check_branch
      %50 = sbr.rel (0) target = $region29
    $region28: #{tpu_custom_call.1} parent=1 // pred_region
      %52 = dma.done [#allocation6], 1024
    $region29: #{tpu_custom_call.1} parent=1 // pred_fallthru
      _
    %v53 = vld [vmem:[#allocation2] sm:$0xff]
    %v54 = vld [vmem:[#allocation2 + $0x8] sm:$0xff]
    %v55 = vpack.c.bf16 %v54, %v53
    %v56 = vld [vmem:[#allocation5] sm:$0xf]
    %v57 = vld [vmem:[#allocation5 + $0x4] sm:$0xf]
    %v58 = vld [vmem:[#allocation5 + $0x8] sm:$0xf]
    %v59 = vld [vmem:[#allocation5 + $0xc] sm:$0xf]
    %v60 = vld [vmem:[#allocation5 + $0x10] sm:$0xf]
    %v61 = vld [vmem:[#allocation5 + $0x14] sm:$0xf]
    %v62 = vld [vmem:[#allocation5 + $0x18] sm:$0xf]
    %v63 = vld [vmem:[#allocation5 + $0x1c] sm:$0xf]
    %v64 = vld [vmem:[#allocation5 + $0x20] sm:$0xf]
    %v65 = vld [vmem:[#allocation5 + $0x24] sm:$0xf]
    %v66 = vld [vmem:[#allocation5 + $0x28] sm:$0xf]
    %v67 = vld [vmem:[#allocation5 + $0x2c] sm:$0xf]
    %v68 = vld [vmem:[#allocation5 + $0x30] sm:$0xf]
    %v69 = vld [vmem:[#allocation5 + $0x34] sm:$0xf]
    %v70 = vld [vmem:[#allocation5 + $0x38] sm:$0xf]
    %v71 = vld [vmem:[#allocation5 + $0x3c] sm:$0xf]
    %v72 = vld [vmem:[%s2] sm:$0x1]
    %v74 = vperm.slane %v72, 0
    %v92 = vunpack.c.l.b16 %v56
    %v93 = vunpack.c.l.b16 %v57
    %v94 = vunpack.c.l.b16 %v58
    %v95 = vunpack.c.l.b16 %v59
    %v96 = vunpack.c.l.b16 %v60
    %v97 = vunpack.c.l.b16 %v61
    %v98 = vunpack.c.l.b16 %v62
    %v99 = vunpack.c.l.b16 %v63
    %v100 = vunpack.c.l.b16 %v64
    %v101 = vunpack.c.l.b16 %v65
    %v102 = vunpack.c.l.b16 %v66
    %v103 = vunpack.c.l.b16 %v67
    %v104 = vunpack.c.l.b16 %v68
    %v105 = vunpack.c.l.b16 %v69
    %v106 = vunpack.c.l.b16 %v70
    %v107 = vunpack.c.l.b16 %v71
    %v108 = vpack.c.b16 %v93, %v92
    %v109 = vpack.c.b16 %v95, %v94
    %v110 = vpack.c.b16 %v97, %v96
    %v111 = vpack.c.b16 %v99, %v98
    %v112 = vpack.c.b16 %v101, %v100
    %v113 = vpack.c.b16 %v103, %v102
    %v114 = vpack.c.b16 %v105, %v104
    %v115 = vpack.c.b16 %v107, %v106
    %124 = vmatpush.bf16.msra.mxu0 %v115
    %125 = vmatpush.bf16.msra.mxu0 %v114
    %126 = vmatpush.bf16.msra.mxu0 %v113
    %127 = vmatpush.bf16.msra.mxu0 %v112
    %128 = vmatpush.bf16.msra.mxu0 %v111
    %129 = vmatpush.bf16.msra.mxu0 %v110
    %130 = vmatpush.bf16.msra.mxu0 %v109
    %131 = vmatpush.bf16.msra.mxu0 %v108
    %132 = vmatmul.bf16.gmra.mxu0 %v55
    %v133 = vpop.f32.mrf.mxu0
    %v134 = vadd.f32 %v74, %v133
    %v135 = vpop.f32.mrf.mxu0
    %v136 = vadd.f32 %v74, %v135
    %137 = vdwg.mxu0
    %v138 = vmul.f32 %v134, 0.5
    %v139 = vmul.f32 %v136, 0.5
    %v140 = vmul.f32 %v134, %v134
    %v141 = vmul.f32 %v136, %v136
    %v142 = vmul.f32 %v140, %v134
    %v143 = vmul.f32 %v141, %v136
    %v144 = vmul.f32 %v142, 0.044715
    %v145 = vmul.f32 %v143, 0.044715
    %v146 = vadd.f32 %v134, %v144
    %v147 = vadd.f32 %v136, %v145
    %v148 = vmul.f32 %v146, 0.7978846
    %v149 = vmul.f32 %v147, 0.7978846
    %v150 = vtanh.pop %v148
    %v151 = vtanh.pop %v149
    %v152 = vadd.f32 %v150, 1.0
    %v153 = vadd.f32 %v151, 1.0
    %v154 = vmul.f32 %v138, %v152
    %v155 = vmul.f32 %v139, %v153
    %156 = vadd.xlane.f32.xlu0 %v154
    %v157 = vpop.xlane.xlu0 %156
    %158 = vadd.xlane.f32.xlu0 %v155
    %v159 = vpop.xlane.xlu0 %158
    %v160 = vrcp.pop 128.0
    %v161 = vmul.f32 128.0, %v160
    %v162 = vsub.f32 1.0, %v161
    %v163 = vmul.f32 %v160, %v162
    %v164 = vadd.f32 %v160, %v163
    %vm165 = vweird.f32 %v160
    %v166 = vsel %vm165, %v160, %v164
    %v167 = vmul.f32 %v157, %v166
    %v168 = vmul.f32 %v159, %v166
    %v169 = vsub.f32 %v154, %v167
    %v170 = vsub.f32 %v155, %v168
    %v171 = vmul.f32 %v169, %v169
    %v172 = vmul.f32 %v170, %v170
    %173 = vadd.xlane.f32.xlu0 %v171
    %v174 = vpop.xlane.xlu0 %173
    %175 = vadd.xlane.f32.xlu0 %v172
    %v176 = vpop.xlane.xlu0 %175
    %v177 = vmul.f32 %v174, %v166
    %v178 = vmul.f32 %v176, %v166
    %v179 = vadd.f32 %v177, 1e-12
    %v180 = vadd.f32 %v178, 1e-12
    %v181 = vrsqrt.pop %v179
    %v182 = vmul.f32 %v181, %v179
    %v183 = vmul.f32 %v182, %v181
    %v184 = vmul.f32 0.5, %v183
    %v185 = vsub.f32 1.5, %v184
    %v186 = vmul.f32 %v181, %v185
    %vm187 = vweird.f32 %v179
    %vm188 = vweird.f32 %v181
    %vm189 = vmor %vm187, %vm188
    %v190 = vsel %vm189, %v181, %v186
    %v191 = vrsqrt.pop %v180
    %v192 = vmul.f32 %v191, %v180
    %v193 = vmul.f32 %v192, %v191
    %v194 = vmul.f32 0.5, %v193
    %v195 = vsub.f32 1.5, %v194
    %v196 = vmul.f32 %v191, %v195
    %vm197 = vweird.f32 %v180
    %vm198 = vweird.f32 %v191
    %vm199 = vmor %vm197, %vm198
    %v200 = vsel %vm199, %v191, %v196
    %v201 = vmul.f32 %v169, %v190
    %v202 = vmul.f32 %v170, %v200
    %v203 = vld [vmem:[%s3] sm:$0x1]
    %v205 = vperm.slane %v203, 0
    %v207 = vmul.f32 %v201, %v205
    %v208 = vmul.f32 %v202, %v205
    %v209 = vld [vmem:[%s4] sm:$0x1]
    %v211 = vperm.slane %v209, 0
    %v213 = vadd.f32 %v207, %v211
    %v214 = vadd.f32 %v208, %v211
    %215 = vst [vmem:[#allocation7] sm:$0xff] %v213
    %216 = vst [vmem:[#allocation7 + $0x8] sm:$0xff] %v214
    // Predicated region
    $region30: #{tpu_custom_call.1} parent=1 // pred_check
      _
    $region31: #{tpu_custom_call.1} parent=1 // pred_check_branch
      %218 = sbr.rel (0) target = $region33
    $region32: #{tpu_custom_call.1} parent=1 // pred_region
      %220 = vsyncadd [#allocation4], 0
      %s221 = sshll.u32 [#allocation7], 4
      %s222 = int_to_ptr.vmem [resolvable:$true] %s221
      %s223 = sshll.u32 %s5, 4
      %s224 = int_to_ptr.hbm [resolvable:$true] %s223
      %229 = dma.vmem_to_hbm [thread:$0]  %s222, 256, %s224, [#allocation4], 128, 128, 8
    $region33: #{tpu_custom_call.1} parent=1 // pred_fallthru
      _
    // Predicated region
    $region34: #{tpu_custom_call.1} parent=1 // pred_check
      _
    $region35: #{tpu_custom_call.1} parent=1 // pred_check_branch
      %231 = sbr.rel (0) target = $region37
    $region36: #{tpu_custom_call.1} parent=1 // pred_region
      %233 = dma.done [#allocation4], 256
    $region37: #{tpu_custom_call.1} parent=1 // pred_fallthru
      _
    %234 = vsyncpa [#allocation3], 1
    %235 = vsyncpa [#allocation6], 1
    %236 = vsyncpa [#allocation4], 1

// kernel: tpu_custom_call.1
$region0: #{tpu_custom_call.1}
  #allocation0 [shape = 'u32[]', space=smem, size = 0x4, offset = 0x4, fixed_abs, tag = 'smem constant byte address 0x4 - core index']
  #allocation1 [shape = 'u32[72,128]{1,0:T(1,128)}', space=vmem, size = 0x9000, scoped, tag = 'internal scratch']
  %s0 = inlined_call_operand.hbm [shape: f32[16,128], index: 0, kind: input, shape index: {}]
  %s1 = inlined_call_operand.hbm [shape: bf16[128,128], index: 1, kind: input, shape index: {}]
  %s2 = inlined_call_operand.vmem [shape: f32[1,128], index: 2, kind: input, shape index: {}]
  %s3 = inlined_call_operand.vmem [shape: f32[1,128], index: 3, kind: input, shape index: {}]
  %s4 = inlined_call_operand.vmem [shape: f32[1,128], index: 4, kind: input, shape index: {}]
  %s5 = inlined_call_operand.hbm [shape: f32[16,128], index: 5, kind: output, shape index: {}]
  %s6 = sld [smem:[#allocation0]]
  $region38: #{tpu_custom_call.1} parent=0
    _
  %s8 = ssub.s32 1, %s6
  %s9 = scalar_select 0, %s8, %s6
  $region1: #{tpu_custom_call.1} parent=0
    #allocation2 [shape = 'u8[8192]{0}', space=vmem, size = 0x2000, scoped, tag = 'input window, operand 0, single buffered']
    #allocation3 [shape = 's32[1]{0}', space=sflag, size = 0x4, scoped, tag = 'scoped memory for tpu_custom_call.1']
    #allocation4 [shape = 's32[1]{0}', space=sflag, size = 0x4, scoped, tag = 'scoped memory for tpu_custom_call.1']
    #allocation5 [shape = 'u8[32768]{0}', space=vmem, size = 0x8000, scoped, tag = 'input window, operand 1, single buffered']
    #allocation6 [shape = 's32[1]{0}', space=sflag, size = 0x4, scoped, tag = 'scoped memory for tpu_custom_call.1']
    #allocation7 [shape = 'u8[8192]{0}', space=vmem, size = 0x2000, scoped, tag = 'output window, operand 0, single buffered']
    %10 = vsyncpa [#allocation3], 0
    %11 = vsyncpa [#allocation6], 0
    %12 = vsyncpa [#allocation4], 0
    // Predicated region
    $region2: #{tpu_custom_call.1} parent=1 // pred_check
      _
    $region3: #{tpu_custom_call.1} parent=1 // pred_check_branch
      %14 = sbr.rel (0) target = $region5
    $region4: #{tpu_custom_call.1} parent=1 // pred_region
      %16 = vsyncadd [#allocation3], 0
      %s17 = sshll.u32 %s0, 4
      %s18 = int_to_ptr.hbm [resolvable:$true] %s17
      %s19 = sshll.u32 [#allocation2], 4
      %s20 = int_to_ptr.vmem [resolvable:$true] %s19
      %25 = dma.hbm_to_vmem [thread:$0]  %s18, 256, %s20, [#allocation3], 128, 128, 8
    $region5: #{tpu_custom_call.1} parent=1 // pred_fallthru
      _
    // Predicated region
    $region6: #{tpu_custom_call.1} parent=1 // pred_check
      _
    $region7: #{tpu_custom_call.1} parent=1 // pred_check_branch
      %27 = sbr.rel (0) target = $region9
    $region8: #{tpu_custom_call.1} parent=1 // pred_region
      %29 = vsyncadd [#allocation6], 0
      %s30 = sshll.u32 %s1, 4
      %s31 = int_to_ptr.hbm [resolvable:$true] %s30
      %s32 = sshll.u32 [#allocation5], 4
      %s33 = int_to_ptr.vmem [resolvable:$true] %s32
      %38 = dma.hbm_to_vmem [thread:$0]  %s31, 1024, %s33, [#allocation6], 64, 64, 4
    $region9: #{tpu_custom_call.1} parent=1 // pred_fallthru
      _
    // Predicated region
    $region10: #{tpu_custom_call.1} parent=1 // pred_check
      _
    $region11: #{tpu_custom_call.1} parent=1 // pred_check_branch
      %40 = sbr.rel (0) target = $region13
    $region12: #{tpu_custom_call.1} parent=1 // pred_region
      _
    $region13: #{tpu_custom_call.1} parent=1 // pred_fallthru
      _
    // Predicated region
    $region14: #{tpu_custom_call.1} parent=1 // pred_check
      _
    $region15: #{tpu_custom_call.1} parent=1 // pred_check_branch
      %42 = sbr.rel (0) target = $region17
    $region16: #{tpu_custom_call.1} parent=1 // pred_region
      _
    $region17: #{tpu_custom_call.1} parent=1 // pred_fallthru
      _
    // Predicated region
    $region18: #{tpu_custom_call.1} parent=1 // pred_check
      _
    $region19: #{tpu_custom_call.1} parent=1 // pred_check_branch
      %44 = sbr.rel (0) target = $region21
    $region20: #{tpu_custom_call.1} parent=1 // pred_region
      _
    $region21: #{tpu_custom_call.1} parent=1 // pred_fallthru
      _
    // Predicated region
    $region22: #{tpu_custom_call.1} parent=1 // pred_check
      _
    $region23: #{tpu_custom_call.1} parent=1 // pred_check_branch
      %46 = sbr.rel (0) target = $region25
    $region24: #{tpu_custom_call.1} parent=1 // pred_region
      %48 = dma.done [#allocation3], 256
    $region25: #{tpu_custom_call.1} parent=1 // pred_fallthru
      _
    // Predicated region
    $region26: #{tpu_custom_call.1} parent=1 // pred_check
      _
    $region27: #{tpu_custom_call.1} parent=1 // pred_check_branch
      %50 = sbr.rel (0) target = $region29
    $region28: #{tpu_custom_call.1} parent=1 // pred_region
      %52 = dma.done [#allocation6], 1024
    $region29: #{tpu_custom_call.1} parent=1 // pred_fallthru
      _
    %v53 = vld [vmem:[#allocation2] sm:$0xff]
    %v54 = vld [vmem:[#allocation2 + $0x8] sm:$0xff]
    %v55 = vpack.c.bf16 %v54, %v53
    %v56 = vld [vmem:[#allocation5] sm:$0xf]
    %v57 = vld [vmem:[#allocation5 + $0x4] sm:$0xf]
    %v58 = vld [vmem:[#allocation5 + $0x8] sm:$0xf]
    %v59 = vld [vmem:[#allocation5 + $0xc] sm:$0xf]
    %v60 = vld [vmem:[#allocation5 + $0x10] sm:$0xf]
    %v61 = vld [vmem:[#allocation5 + $0x14] sm:$0xf]
    %v62 = vld [vmem:[#allocation5 + $0x18] sm:$0xf]
    %v63 = vld [vmem:[#allocation5 + $0x1c] sm:$0xf]
    %v64 = vld [vmem:[#allocation5 + $0x20] sm:$0xf]
    %v65 = vld [vmem:[#allocation5 + $0x24] sm:$0xf]
    %v66 = vld [vmem:[#allocation5 + $0x28] sm:$0xf]
    %v67 = vld [vmem:[#allocation5 + $0x2c] sm:$0xf]
    %v68 = vld [vmem:[#allocation5 + $0x30] sm:$0xf]
    %v69 = vld [vmem:[#allocation5 + $0x34] sm:$0xf]
    %v70 = vld [vmem:[#allocation5 + $0x38] sm:$0xf]
    %v71 = vld [vmem:[#allocation5 + $0x3c] sm:$0xf]
    %v72 = vld [vmem:[%s2] sm:$0x1]
    %v74 = vperm.slane %v72, 0
    %v92 = vunpack.c.l.b16 %v56
    %v93 = vunpack.c.l.b16 %v57
    %v94 = vunpack.c.l.b16 %v58
    %v95 = vunpack.c.l.b16 %v59
    %v96 = vunpack.c.l.b16 %v60
    %v97 = vunpack.c.l.b16 %v61
    %v98 = vunpack.c.l.b16 %v62
    %v99 = vunpack.c.l.b16 %v63
    %v100 = vunpack.c.l.b16 %v64
    %v101 = vunpack.c.l.b16 %v65
    %v102 = vunpack.c.l.b16 %v66
    %v103 = vunpack.c.l.b16 %v67
    %v104 = vunpack.c.l.b16 %v68
    %v105 = vunpack.c.l.b16 %v69
    %v106 = vunpack.c.l.b16 %v70
    %v107 = vunpack.c.l.b16 %v71
    %v108 = vpack.c.b16 %v93, %v92
    %v109 = vpack.c.b16 %v95, %v94
    %v110 = vpack.c.b16 %v97, %v96
    %v111 = vpack.c.b16 %v99, %v98
    %v112 = vpack.c.b16 %v101, %v100
    %v113 = vpack.c.b16 %v103, %v102
    %v114 = vpack.c.b16 %v105, %v104
    %v115 = vpack.c.b16 %v107, %v106
    %124 = vmatpush.bf16.msra.mxu0 %v115
    %125 = vmatpush.bf16.msra.mxu0 %v114
    %126 = vmatpush.bf16.msra.mxu0 %v113
    %127 = vmatpush.bf16.msra.mxu0 %v112
    %128 = vmatpush.bf16.msra.mxu0 %v111
    %129 = vmatpush.bf16.msra.mxu0 %v110
    %130 = vmatpush.bf16.msra.mxu0 %v109
    %131 = vmatpush.bf16.msra.mxu0 %v108
    %132 = vmatmul.bf16.gmra.mxu0 %v55
    %v133 = vpop.f32.mrf.mxu0
    %v134 = vadd.f32 %v74, %v133
    %v135 = vpop.f32.mrf.mxu0
    %v136 = vadd.f32 %v74, %v135
    %137 = vdwg.mxu0
    %v138 = vmul.f32 %v134, 0.5
    %v139 = vmul.f32 %v136, 0.5
    %v140 = vmul.f32 %v134, %v134
    %v141 = vmul.f32 %v136, %v136
    %v142 = vmul.f32 %v140, %v134
    %v143 = vmul.f32 %v141, %v136
    %v144 = vmul.f32 %v142, 0.044715
    %v145 = vmul.f32 %v143, 0.044715
    %v146 = vadd.f32 %v134, %v144
    %v147 = vadd.f32 %v136, %v145
    %v148 = vmul.f32 %v146, 0.7978846
    %v149 = vmul.f32 %v147, 0.7978846
    %v150 = vtanh.pop %v148
    %v151 = vtanh.pop %v149
    %v152 = vadd.f32 %v150, 1.0
    %v153 = vadd.f32 %v151, 1.0
    %v154 = vmul.f32 %v138, %v152
    %v155 = vmul.f32 %v139, %v153
    %156 = vadd.xlane.f32.xlu0 %v154
    %v157 = vpop.xlane.xlu0 %156
    %158 = vadd.xlane.f32.xlu0 %v155
    %v159 = vpop.xlane.xlu0 %158
    %v160 = vrcp.pop 128.0
    %v161 = vmul.f32 128.0, %v160
    %v162 = vsub.f32 1.0, %v161
    %v163 = vmul.f32 %v160, %v162
    %v164 = vadd.f32 %v160, %v163
    %vm165 = vweird.f32 %v160
    %v166 = vsel %vm165, %v160, %v164
    %v167 = vmul.f32 %v157, %v166
    %v168 = vmul.f32 %v159, %v166
    %v169 = vsub.f32 %v154, %v167
    %v170 = vsub.f32 %v155, %v168
    %v171 = vmul.f32 %v169, %v169
    %v172 = vmul.f32 %v170, %v170
    %173 = vadd.xlane.f32.xlu0 %v171
    %v174 = vpop.xlane.xlu0 %173
    %175 = vadd.xlane.f32.xlu0 %v172
    %v176 = vpop.xlane.xlu0 %175
    %v177 = vmul.f32 %v174, %v166
    %v178 = vmul.f32 %v176, %v166
    %v179 = vadd.f32 %v177, 1e-12
    %v180 = vadd.f32 %v178, 1e-12
    %v181 = vrsqrt.pop %v179
    %v182 = vmul.f32 %v181, %v179
    %v183 = vmul.f32 %v182, %v181
    %v184 = vmul.f32 0.5, %v183
    %v185 = vsub.f32 1.5, %v184
    %v186 = vmul.f32 %v181, %v185
    %vm187 = vweird.f32 %v179
    %vm188 = vweird.f32 %v181
    %vm189 = vmor %vm187, %vm188
    %v190 = vsel %vm189, %v181, %v186
    %v191 = vrsqrt.pop %v180
    %v192 = vmul.f32 %v191, %v180
    %v193 = vmul.f32 %v192, %v191
    %v194 = vmul.f32 0.5, %v193
    %v195 = vsub.f32 1.5, %v194
    %v196 = vmul.f32 %v191, %v195
    %vm197 = vweird.f32 %v180
    %vm198 = vweird.f32 %v191
    %vm199 = vmor %vm197, %vm198
    %v200 = vsel %vm199, %v191, %v196
    %v201 = vmul.f32 %v169, %v190
    %v202 = vmul.f32 %v170, %v200
    %v203 = vld [vmem:[%s3] sm:$0x1]
    %v205 = vperm.slane %v203, 0
    %v207 = vmul.f32 %v201, %v205
    %v208 = vmul.f32 %v202, %v205
    %v209 = vld [vmem:[%s4] sm:$0x1]
    %v211 = vperm.slane %v209, 0
    %v213 = vadd.f32 %v207, %v211
    %v214 = vadd.f32 %v208, %v211
    %215 = vst [vmem:[#allocation7] sm:$0xff] %v213
    %216 = vst [vmem:[#allocation7 + $0x8] sm:$0xff] %v214
    // Predicated region
    $region30: #{tpu_custom_call.1} parent=1 // pred_check
      _
    $region31: #{tpu_custom_call.1} parent=1 // pred_check_branch
      %218 = sbr.rel (0) target = $region33
    $region32: #{tpu_custom_call.1} parent=1 // pred_region
      %220 = vsyncadd [#allocation4], 0
      %s221 = sshll.u32 [#allocation7], 4
      %s222 = int_to_ptr.vmem [resolvable:$true] %s221
      %s223 = sshll.u32 %s5, 4
      %s224 = int_to_ptr.hbm [resolvable:$true] %s223
      %229 = dma.vmem_to_hbm [thread:$0]  %s222, 256, %s224, [#allocation4], 128, 128, 8
    $region33: #{tpu_custom_call.1} parent=1 // pred_fallthru
      _
    // Predicated region
    $region34: #{tpu_custom_call.1} parent=1 // pred_check
      _
    $region35: #{tpu_custom_call.1} parent=1 // pred_check_branch
      %231 = sbr.rel (0) target = $region37
    $region36: #{tpu_custom_call.1} parent=1 // pred_region
      %233 = dma.done [#allocation4], 256
    $region37: #{tpu_custom_call.1} parent=1 // pred_fallthru
      _
    %234 = vsyncpa [#allocation3], 1
    %235 = vsyncpa [#allocation6], 1
    %236 = vsyncpa [#allocation4], 1

</llo_original>
